<compile_context>
chip_gen: v5e
topology: v5e:2x2
jax: 0.10.0
libtpu: 0.0.40
codegen_flags: <defaults>
</compile_context>

<pallas_src>
import math

import jax
import jax.numpy as jnp
from jax.experimental import pallas as pl
from jax.experimental.pallas import tpu as pltpu


def _dropout_tied_kernel(x_ref, m_ref, o_ref):
    # m_ref folds keep-mask and 1/(1-p) in f32; shape (Rt, 1) broadcasts along
    # lanes.  Multiply in f32, cast on store: one widening cast + one vmul per
    # vreg -- pure HBM-bandwidth-bound streaming.
    x = x_ref[...].astype(jnp.float32)
    o_ref[...] = (x * m_ref[...]).astype(o_ref.dtype)


def _round_up(a: int, b: int) -> int:
    return ((a + b - 1) // b) * b


def _vmem_budget():
    """Per-generation VMEM plan -> (tile budget bytes, vmem_limit_bytes).

    v5e/v6e: 128 MiB physical -> limit 64 MiB, tile budget ~48 MiB.
    v7x:      64 MiB per TC    -> limit 48 MiB, tile budget ~36 MiB.
    """
    try:
        cap = pltpu.get_tpu_info().vmem_capacity_bytes
    except Exception:
        cap = 64 * 1024 * 1024  # conservative (v7x-sized) fallback
    limit = min(64 * 1024 * 1024, cap * 3 // 4)
    limit = max(limit, 32 * 1024 * 1024)
    budget = limit * 3 // 4
    return budget, limit


def _choose_tiles(R: int, L: int, itemsize: int, budget_bytes: int):
    """Pick (Rt, TL, sub) for blocks over the collapsed (R=B*D, L) view.

    Working set ~ 4*Rt*TL*itemsize (x + out, double-buffered) plus the
    lane-padded, double-buffered f32 multiplier column (2*Rt*128*4 bytes).
    """
    sub = max(8, 32 // itemsize)            # native sublane packing for dtype
    r_pad = _round_up(R, sub)
    tl_full = _round_up(L, 128)
    mult_row_bytes = 2 * 128 * 4            # double-buffered f32 column, lane-padded
    row_bytes_full = 4 * tl_full * itemsize + mult_row_bytes
    if sub * row_bytes_full <= budget_bytes:
        # Full-L contiguous rows (single-stride DMA slabs); as many rows as fit.
        rt_cap = (budget_bytes // row_bytes_full) // sub * sub
        Rt = min(r_pad, max(sub, rt_cap))
        TL = tl_full
    else:
        # Rows too long for the budget: tile L as well.
        Rt = sub
        tl_cap = ((budget_bytes - sub * mult_row_bytes)
                  // (4 * sub * itemsize)) // 128 * 128
        TL = max(128, min(2048, tl_full, tl_cap))
    return Rt, TL, sub


def _split_for_megacore(R: int, L: int, Rt: int, TL: int, sub: int):
    """Guarantee >=2 grid blocks (when legal) so v7x's two TCs both get work."""
    if pl.cdiv(R, Rt) * pl.cdiv(L, TL) >= 2:
        return Rt, TL
    if R >= 2 * sub:
        Rt = _round_up(pl.cdiv(R, 2), sub)
    elif TL >= 256:
        TL = _round_up(pl.cdiv(TL, 2), 128)
    return Rt, TL


def dropout_nd(x, seed, p: float = 0.5, tie: bool = True, transposed: bool = True,
               training: bool = True, donate_x: bool = False):
    """Pallas implementation of DropoutNd.forward (default tie/transposed config).

    x:    (B, D, *lengths) channel-first array.
    seed: python int used to derive the tied (B, D) dropout mask.
    """
    p = float(p)
    if p < 0 or p >= 1:
        raise ValueError(f"dropout probability has to be in [0, 1), but got {p}")
    if not training or p == 0.0:
        return x
    if not (tie and transposed):
        # TODO(synk): tie=False / transposed=False variants not implemented;
        # only the module defaults (tie=True, transposed=True) are supported.
        raise NotImplementedError("Only tie=True, transposed=True is implemented.")

    orig_shape = x.shape
    B, D = int(orig_shape[0]), int(orig_shape[1])
    L = int(math.prod(orig_shape[2:])) if len(orig_shape) > 2 else 1
    R = B * D

    # Tied (B, D) keep-mask folded with 1/(1-p); tiny, computed outside the
    # kernel and kept in f32 (the kernel multiplies in f32, casts on store).
    scale = 1.0 / (1.0 - p)
    key = jax.random.PRNGKey(seed)
    keep = jax.random.uniform(key, (B, D), dtype=jnp.float32) < (1.0 - p)
    mult = jnp.where(keep, scale, 0.0).reshape(R, 1)          # f32, (B*D, 1)

    x2 = x.reshape(R, L)

    # Small-L fast path: an output block narrower than 128 lanes lowers to
    # masked vst.msk partial stores (~4.5x wall-vs-compute); plain XLA is
    # already optimal for this tiny case.
    if L < 128:
        out2 = (x2.astype(jnp.float32) * mult).astype(x.dtype)
        return out2.reshape(orig_shape)

    itemsize = jnp.dtype(x.dtype).itemsize
    budget, vmem_limit = _vmem_budget()
    Rt, TL, sub = _choose_tiles(R, L, itemsize, budget)
    Rt, TL = _split_for_megacore(R, L, Rt, TL, sub)

    # L innermost: the multiplier's block index is li-independent, so its DMA
    # is skipped across the whole inner L sweep (tile stays resident in VMEM).
    grid = (pl.cdiv(R, Rt), pl.cdiv(L, TL))

    out2 = pl.pallas_call(
        _dropout_tied_kernel,
        out_shape=jax.ShapeDtypeStruct((R, L), x.dtype),
        grid=grid,
        in_specs=[
            pl.BlockSpec((Rt, TL), lambda ri, li: (ri, li)),
            pl.BlockSpec((Rt, 1), lambda ri, li: (ri, 0)),
        ],
        out_specs=pl.BlockSpec((Rt, TL), lambda ri, li: (ri, li)),
        compiler_params=pltpu.CompilerParams(
            # Both axes fully independent (mask precomputed) -> megacore OK.
            dimension_semantics=("parallel", "parallel"),
            vmem_limit_bytes=vmem_limit,
        ),
        # Alias x -> out only when the caller donates x (halves peak HBM
        # footprint; bytes moved are unchanged).
        input_output_aliases={0: 0} if donate_x else {},
    )(x2, mult)

    return out2.reshape(orig_shape)


if __name__ == "__main__":
    key = jax.random.PRNGKey(0)
    B, D, H, W = 2, 4, 16, 16
    p = 0.5
    seed = 0

    x = jax.random.normal(key, (B, D, H, W), dtype=jnp.float32)

    out = dropout_nd(x, seed=seed, p=p, tie=True, transposed=True, training=True)
    out = jax.block_until_ready(out)

    # Exact reference: same tied (B, D) mask, folded with 1/(1-p), in f32.
    scale = 1.0 / (1.0 - p)
    keep = jax.random.uniform(jax.random.PRNGKey(seed), (B, D), dtype=jnp.float32) < (1.0 - p)
    ref = x * jnp.where(keep, scale, 0.0)[:, :, None, None]
    ok = bool(jnp.allclose(out, ref, rtol=1e-6, atol=1e-6))

    # Structural check: mask tied across spatial dims -> each (b, d) slice is
    # either all-zeros or exactly x * 1/(1-p).
    for b in range(B):
        for d in range(D):
            o = out[b, d]
            dropped = bool(jnp.all(o == 0.0))
            kept = bool(jnp.allclose(o, x[b, d] * scale, rtol=1e-6, atol=1e-6))
            ok = ok and (dropped or kept)

    # Eval mode must be identity.
    out_eval = dropout_nd(x, seed=seed, p=p, training=False)
    ok = ok and bool(jnp.array_equal(out_eval, x))

    # Unaligned shape: exercises cdiv tiling / padded edge blocks + megacore row split.
    x2 = jax.random.normal(jax.random.PRNGKey(1), (2, 12, 200), dtype=jnp.float32)
    out2 = jax.block_until_ready(dropout_nd(x2, seed=7, p=0.25))
    keep2 = jax.random.uniform(jax.random.PRNGKey(7), (2, 12), dtype=jnp.float32) < 0.75
    ref2 = x2 * jnp.where(keep2, 1.0 / 0.75, 0.0)[:, :, None]
    ok = ok and bool(jnp.allclose(out2, ref2, rtol=1e-6, atol=1e-6))

    # Small-L fast path (L < 128 -> plain XLA multiply, no masked partial stores).
    x3 = jax.random.normal(jax.random.PRNGKey(2), (2, 4, 16), dtype=jnp.float32)
    out3 = jax.block_until_ready(dropout_nd(x3, seed=11, p=0.5))
    keep3 = jax.random.uniform(jax.random.PRNGKey(11), (2, 4), dtype=jnp.float32) < 0.5
    ref3 = x3 * jnp.where(keep3, 2.0, 0.0)[:, :, None]
    ok = ok and bool(jnp.allclose(out3, ref3, rtol=1e-6, atol=1e-6))

    # bf16 input: exercises the dtype-aware sublane tile (16) and f32 multiply path.
    x4 = jax.random.normal(jax.random.PRNGKey(3), (3, 5, 7, 64), dtype=jnp.bfloat16)
    out4 = jax.block_until_ready(dropout_nd(x4, seed=3, p=0.1))
    keep4 = jax.random.uniform(jax.random.PRNGKey(3), (3, 5), dtype=jnp.float32) < 0.9
    ref4 = (x4.astype(jnp.float32)
            * jnp.where(keep4, 1.0 / 0.9, 0.0)[:, :, None, None]).astype(jnp.bfloat16)
    ok = ok and bool(jnp.allclose(out4.astype(jnp.float32), ref4.astype(jnp.float32),
                                  rtol=1e-2, atol=1e-2))

    assert ok, "DropoutNd Pallas kernel produced inconsistent mask/scale"
    print("KERNEL_OK")
</pallas_src>

<mosaic_0001>
module attributes {stable_mosaic.version = 11 : i64} {
  func.func @_dropout_tied_kernel(%arg0: i32, %arg1: i32, %arg2: memref<8x128xf32, #tpu.memory_space<vmem>>, %arg3: memref<8x1xf32, #tpu.memory_space<vmem>>, %arg4: memref<8x128xf32, #tpu.memory_space<vmem>>) attributes {dimension_semantics = [#tpu.dimension_semantics<parallel>, #tpu.dimension_semantics<parallel>], iteration_bounds = array<i64: 1, 2>, scalar_prefetch = 0 : i64, scratch_operands = 0 : i64, tpu.core_type = #tpu.core_type<tc>, window_params = [{transform_indices = @transform_0, window_bounds = array<i64: 8, 128>}, {transform_indices = @transform_1, window_bounds = array<i64: 8, 1>}, {transform_indices = @transform_2, window_bounds = array<i64: 8, 128>}]} {
    %c0 = arith.constant 0 : index
    %c0_0 = arith.constant 0 : index
    %0 = vector.load %arg2[%c0, %c0_0] : memref<8x128xf32, #tpu.memory_space<vmem>>, vector<8x128xf32>
    %c0_1 = arith.constant 0 : index
    %c0_2 = arith.constant 0 : index
    %1 = vector.load %arg3[%c0_1, %c0_2] : memref<8x1xf32, #tpu.memory_space<vmem>>, vector<8x1xf32>
    %2 = vector.broadcast %1 : vector<8x1xf32> to vector<8x128xf32>
    %3 = arith.mulf %0, %2 : vector<8x128xf32>
    %c0_3 = arith.constant 0 : index
    %c0_4 = arith.constant 0 : index
    %4 = vector.load %arg4[%c0_3, %c0_4] : memref<8x128xf32, #tpu.memory_space<vmem>>, vector<8x128xf32>
    tpu.vector_store %arg4[%c0_3, %c0_4], %3 {strides = array<i32>} : memref<8x128xf32, #tpu.memory_space<vmem>>, vector<8x128xf32>,
    return
  }
  func.func @transform_0(%arg0: i32, %arg1: i32) -> (i32, i32) {
    %c0_i32 = arith.constant 0 : i32
    return %arg0, %arg1 : i32, i32
  }
  func.func @transform_1(%arg0: i32, %arg1: i32) -> (i32, i32) {
    %c0_i32 = arith.constant 0 : i32
    %c0_i32_0 = arith.constant 0 : i32
    return %arg0, %c0_i32 : i32, i32
  }
  func.func @transform_2(%arg0: i32, %arg1: i32) -> (i32, i32) {
    %c0_i32 = arith.constant 0 : i32
    return %arg0, %arg1 : i32, i32
  }
}

</mosaic_0001>

<llo_original>
// kernel: tpu_custom_call.1
$region0: #{tpu_custom_call.1}
  #allocation0 [shape = 'u32[]', space=smem, size = 0x4, offset = 0x4, fixed_abs, tag = 'smem constant byte address 0x4 - core index']
  #allocation1 [shape = 'u32[72,128]{1,0:T(1,128)}', space=vmem, size = 0x9000, scoped, tag = 'internal scratch']
  %s0 = inlined_call_operand.hbm [shape: f32[8,256], index: 0, kind: input, shape index: {}]
  %s1 = inlined_call_operand.vmem [shape: f32[8,1], index: 1, kind: input, shape index: {}]
  %s2 = inlined_call_operand.hbm [shape: f32[8,256], index: 2, kind: output, shape index: {}]
  %s3 = sld [smem:[#allocation0]]
  $region45: #{tpu_custom_call.1} parent=0
    _
  %s5 = ssub.s32 1, %s3
  %s6 = scalar_select 0, %s5, %s3
  $region1: #{tpu_custom_call.1} parent=0
    #allocation2 [shape = 'u8[8192]{0}', space=vmem, size = 0x2000, scoped, tag = 'input window, operand 0']
    #allocation3 [shape = 's32[2]{0}', space=sflag, size = 0x8, scoped, tag = 'scoped memory for tpu_custom_call.1']
    #allocation4 [shape = 's32[2]{0}', space=sflag, size = 0x8, scoped, tag = 'scoped memory for tpu_custom_call.1']
    #allocation5 [shape = 'u8[8192]{0}', space=vmem, size = 0x2000, scoped, tag = 'output window, operand 0']
    %7 = vsyncpa [#allocation3], 0
    %s8 = scalar_lea.sflag [#allocation3], 1
    %9 = vsyncpa %s8, 0
    %10 = vsyncpa [#allocation4], 0
    %s11 = scalar_lea.sflag [#allocation4], 1
    %12 = vsyncpa %s11, 0
    loop: start=0, step=1, limit=4
    $region2: #{tpu_custom_call.1} parent=1 // loop_pre_header
      _
    $region3: #{tpu_custom_call.1} parent=1 // loop_header
      %s14 = sphi 0, %s18
      %p15 = scmp.ge.s32.totalorder %s14, 4
      %s21 = sphi 0, %s33
      %s22 = sphi 0, %s29
      %s23 = sphi 0, %s21
      %s24 = sphi 0, %s22
      %s25 = sphi 0, %s23
      %s26 = sphi 0, %s24
      %s38 = sphi 0, %s40
      %s41 = sphi 0, %s38
      %s42 = sphi 0, %s41
      %s58 = sphi 0, %s42
      %s64 = sphi 0, %s66
      %s67 = sphi 0, %s64
      %s68 = sphi 0, %s67
      %s84 = sphi 0, %s68
      %s92 = sphi 0, %s94
      %s95 = sphi 0, %s92
      %s96 = sphi 0, %s95
      %s112 = sphi 0, %s96
    $region4: #{tpu_custom_call.1} parent=1 // loop_header_branch
      %17 = sbr.rel (%p15) target = $region8
    $region5: #{tpu_custom_call.1} parent=1 // loop_body
      %s19 = ssub.s32 %s14, 1
      %s20 = ssub.s32 %s14, 2
      %s27 = sadd.s32 1, %s22
      %p28 = scmp.ge.s32.totalorder %s27, 2
      %s29 = scalar_select %p28, 0, %s27
      %s30 = sadd.s32 1, %s21
      %s31 = scalar_select %p28, %s30, %s21
      %p32 = scmp.ge.s32.totalorder %s31, 1
      %s33 = scalar_select %p32, 0, %s31
      %s34 = ssub.s32 %s21, %s33
      %s35 = ssub.s32 %s22, %s29
      %s36 = sor.u32 %s34, %s35
      %p37 = scmp.eq.s32.totalorder %s36, 0
      %s39 = sadd.s32 %s38, 1
      %s40 = scalar_select %p37, %s38, %s39
      %p43 = pneg %p37
      %p44 = scmp.eq.s32.totalorder %s14, 1
      %p45 = por %p43, %p44
      %p46 = scmp.ne.s32.totalorder %s38, %s41
      %p47 = scmp.eq.s32.totalorder %s14, 0
      %p48 = por %p46, %p47
      %p49 = scmp.ne.s32.totalorder %s38, %s41
      %p50 = scmp.eq.s32.totalorder %s19, 1
      %p51 = por %p49, %p50
      %p52 = scmp.ne.s32.totalorder %s41, %s42
      %p53 = scmp.eq.s32.totalorder %s19, 0
      %p54 = por %p52, %p53
      %p55 = scmp.ne.s32.totalorder %s41, %s42
      %p56 = scmp.eq.s32.totalorder %s20, 1
      %p57 = por %p55, %p56
      %p59 = scmp.ne.s32.totalorder %s42, %s58
      %p60 = scmp.eq.s32.totalorder %s20, 0
      %p61 = por %p59, %p60
      %s62 = ssub.s32 %s21, %s33
      %p63 = scmp.eq.s32.totalorder %s62, 0
      %s65 = sadd.s32 %s64, 1
      %s66 = scalar_select %p63, %s64, %s65
      %p69 = pneg %p63
      %p70 = scmp.eq.s32.totalorder %s14, 1
      %p71 = por %p69, %p70
      %p72 = scmp.ne.s32.totalorder %s64, %s67
      %p73 = scmp.eq.s32.totalorder %s14, 0
      %p74 = por %p72, %p73
      %p75 = scmp.ne.s32.totalorder %s64, %s67
      %p76 = scmp.eq.s32.totalorder %s19, 1
      %p77 = por %p75, %p76
      %p78 = scmp.ne.s32.totalorder %s67, %s68
      %p79 = scmp.eq.s32.totalorder %s19, 0
      %p80 = por %p78, %p79
      %p81 = scmp.ne.s32.totalorder %s67, %s68
      %p82 = scmp.eq.s32.totalorder %s20, 1
      %p83 = por %p81, %p82
      %p85 = scmp.ne.s32.totalorder %s68, %s84
      %p86 = scmp.eq.s32.totalorder %s20, 0
      %p87 = por %p85, %p86
      %s88 = ssub.s32 %s21, %s33
      %s89 = ssub.s32 %s22, %s29
      %s90 = sor.u32 %s88, %s89
      %p91 = scmp.eq.s32.totalorder %s90, 0
      %s93 = sadd.s32 %s92, 1
      %s94 = scalar_select %p91, %s92, %s93
      %p97 = pneg %p91
      %p98 = scmp.eq.s32.totalorder %s14, 1
      %p99 = por %p97, %p98
      %p100 = scmp.ne.s32.totalorder %s92, %s95
      %p101 = scmp.eq.s32.totalorder %s14, 0
      %p102 = por %p100, %p101
      %p103 = scmp.ne.s32.totalorder %s92, %s95
      %p104 = scmp.eq.s32.totalorder %s19, 1
      %p105 = por %p103, %p104
      %p106 = scmp.ne.s32.totalorder %s95, %s96
      %p107 = scmp.eq.s32.totalorder %s19, 0
      %p108 = por %p106, %p107
      %p109 = scmp.ne.s32.totalorder %s95, %s96
      %p110 = scmp.eq.s32.totalorder %s20, 1
      %p111 = por %p109, %p110
      %p113 = scmp.ne.s32.totalorder %s96, %s112
      %p114 = scmp.eq.s32.totalorder %s20, 0
      %p115 = por %p113, %p114
      %p116 = scmp.le.s32.totalorder 1, %s14
      %p117 = scmp.lt.s32.totalorder %s14, 3
      %p118 = pnand %p116, %p117
      %p119 = pneg %p118
      // Predicated region
      $region9: #{tpu_custom_call.1} parent=5 // pred_check
        _
      $region10: #{tpu_custom_call.1} parent=5 // pred_check_branch
        %121 = sbr.rel (%p118) target = $region12
      $region11: #{tpu_custom_call.1} parent=5 // pred_region
        %s122 = ssub.s32 %s14, 1
        // Predicated region
        $region13: #{tpu_custom_call.1} parent=11 // pred_check
          %p123 = pneg %p80
        $region14: #{tpu_custom_call.1} parent=11 // pred_check_branch
          %125 = sbr.rel (%p123) target = $region16
        $region15: #{tpu_custom_call.1} parent=11 // pred_region
          %p126 = scmp.lt.s32.totalorder %s23, 0
          %s127 = scalar_select %p126, %s23, 0
          %s128 = smul.addr %s127, 8
          %s129 = scalar_lea.vmem %s1, %s128
        $region16: #{tpu_custom_call.1} parent=11 // pred_fallthru
          _
      $region12: #{tpu_custom_call.1} parent=5 // pred_fallthru
        _
      %p130 = scmp.lt.s32.totalorder %s14, 2
      // Predicated region
      $region17: #{tpu_custom_call.1} parent=5 // pred_check
        %p131 = pneg %p130
      $region18: #{tpu_custom_call.1} parent=5 // pred_check_branch
        %133 = sbr.rel (%p131) target = $region20
      $region19: #{tpu_custom_call.1} parent=5 // pred_region
        // Predicated region
        $region21: #{tpu_custom_call.1} parent=19 // pred_check
          %p134 = pneg %p48
        $region22: #{tpu_custom_call.1} parent=19 // pred_check_branch
          %136 = sbr.rel (%p134) target = $region24
        $region23: #{tpu_custom_call.1} parent=19 // pred_region
          %s137 = sand.u32 %s38, 1
          %s138 = scalar_lea.sflag [#allocation3], %s137
          %s139 = sand.u32 %s38, 1
          %s140 = smul.addr %s139, 8
          %s141 = scalar_lea.vmem [#allocation2], %s140
          %143 = vsyncadd %s138, 0
          %s144 = smul.addr %s21, 2
          %s145 = sadd.s32 %s22, %s144
          %s146 = smul.addr %s145, 8
          %s147 = scalar_lea.hbm %s0, %s146
          %s149 = sshll.u32 %s147, 4
          %s150 = int_to_ptr.hbm [resolvable:$true] %s149
          %s151 = sshll.u32 %s141, 4
          %s152 = int_to_ptr.vmem [resolvable:$true] %s151
          %154 = dma.hbm_to_vmem [thread:$0]  %s150, 128, %s152, %s138
        $region24: #{tpu_custom_call.1} parent=19 // pred_fallthru
          _
      $region20: #{tpu_custom_call.1} parent=5 // pred_fallthru
        _
      %p155 = scmp.le.s32.totalorder 1, %s14
      %p156 = scmp.lt.s32.totalorder %s14, 3
      %p157 = pnand %p155, %p156
      %p158 = pneg %p157
      // Predicated region
      $region25: #{tpu_custom_call.1} parent=5 // pred_check
        _
      $region26: #{tpu_custom_call.1} parent=5 // pred_check_branch
        %160 = sbr.rel (%p157) target = $region28
      $region27: #{tpu_custom_call.1} parent=5 // pred_region
        %s161 = ssub.s32 %s14, 1
        %s162 = sand.u32 %s41, 1
        %s163 = scalar_lea.sflag [#allocation3], %s162
        %s164 = sand.u32 %s41, 1
        %s165 = smul.addr %s164, 8
        %s166 = scalar_lea.vmem [#allocation2], %s165
        // Predicated region
        $region29: #{tpu_custom_call.1} parent=27 // pred_check
          %p167 = pneg %p54
        $region30: #{tpu_custom_call.1} parent=27 // pred_check_branch
          %169 = sbr.rel (%p167) target = $region32
        $region31: #{tpu_custom_call.1} parent=27 // pred_region
          %171 = dma.done %s163, 128
        $region32: #{tpu_custom_call.1} parent=27 // pred_fallthru
          _
        %s172 = sand.u32 %s41, 1
        %s173 = scalar_lea.sflag [#allocation3], %s172
        %s174 = sand.u32 %s41, 1
        %s175 = smul.addr %s174, 8
        %s176 = scalar_lea.vmem [#allocation2], %s175
        %p177 = pneg %p54
        %p178 = pneg %p51
        %p179 = scmp.lt.s32.totalorder %s23, 0
        %s180 = scalar_select %p179, %s23, 0
        %s181 = smul.addr %s180, 8
        %s182 = scalar_lea.vmem %s1, %s181
        %p183 = pneg %p80
        %p184 = pneg %p77
        %p185 = pneg %p108
        %p186 = pneg %p105
        %s187 = sand.u32 %s95, 1
        %s188 = scalar_lea.sflag [#allocation4], %s187
        %s189 = sand.u32 %s95, 1
        %s190 = smul.addr %s189, 8
        %s191 = scalar_lea.vmem [#allocation5], %s190
        %p192 = scmp.lt.s32.totalorder %s23, 0
        %s193 = scalar_select %p192, %s23, 0
        %s194 = smul.addr %s193, 8
        %s195 = scalar_lea.vmem %s1, %s194
        %v196 = vld [vmem:[%s166] sm:$0xff]
        %v197 = vld [vmem:[%s195] sm:$0xff]
        %199 = vset.pattern.permute.xlu0 0
        %200 = vperm.xlu0 %199, %v197
        %v201 = vpop.permute.xlu0 %200
        %v203 = vmul.f32 %v196, %v201
        %204 = vst [vmem:[%s191] sm:$0xff] %v203
        %s205 = sand.u32 %s95, 1
        %s206 = scalar_lea.sflag [#allocation4], %s205
        %s207 = sand.u32 %s95, 1
        %s208 = smul.addr %s207, 8
        %s209 = scalar_lea.vmem [#allocation5], %s208
        // Predicated region
        $region33: #{tpu_custom_call.1} parent=27 // pred_check
          %p210 = pneg %p105
        $region34: #{tpu_custom_call.1} parent=27 // pred_check_branch
          %212 = sbr.rel (%p210) target = $region36
        $region35: #{tpu_custom_call.1} parent=27 // pred_region
          %214 = vsyncadd %s206, 0
          %s215 = smul.addr %s23, 2
          %s216 = sadd.s32 %s24, %s215
          %s217 = smul.addr %s216, 8
          %s218 = scalar_lea.hbm %s2, %s217
          %s220 = sshll.u32 %s209, 4
          %s221 = int_to_ptr.vmem [resolvable:$true] %s220
          %s222 = sshll.u32 %s218, 4
          %s223 = int_to_ptr.hbm [resolvable:$true] %s222
          %225 = dma.vmem_to_hbm [thread:$0]  %s221, 128, %s223, %s206
        $region36: #{tpu_custom_call.1} parent=27 // pred_fallthru
          _
      $region28: #{tpu_custom_call.1} parent=5 // pred_fallthru
        _
      %p226 = scmp.le.s32.totalorder 2, %s14
      // Predicated region
      $region37: #{tpu_custom_call.1} parent=5 // pred_check
        %p227 = pneg %p226
      $region38: #{tpu_custom_call.1} parent=5 // pred_check_branch
        %229 = sbr.rel (%p227) target = $region40
      $region39: #{tpu_custom_call.1} parent=5 // pred_region
        %s230 = ssub.s32 %s14, 2
        // Predicated region
        $region41: #{tpu_custom_call.1} parent=39 // pred_check
          %p231 = pneg %p111
        $region42: #{tpu_custom_call.1} parent=39 // pred_check_branch
          %233 = sbr.rel (%p231) target = $region44
        $region43: #{tpu_custom_call.1} parent=39 // pred_region
          %s234 = sand.u32 %s96, 1
          %s235 = scalar_lea.sflag [#allocation4], %s234
          %s236 = sand.u32 %s96, 1
          %s237 = smul.addr %s236, 8
          %s238 = scalar_lea.vmem [#allocation5], %s237
          %240 = dma.done %s235, 128
        $region44: #{tpu_custom_call.1} parent=39 // pred_fallthru
          _
      $region40: #{tpu_custom_call.1} parent=5 // pred_fallthru
        _
    $region6: #{tpu_custom_call.1} parent=1 // loop_footer
      %s18 = sadd.s32 1, %s14
    $region7: #{tpu_custom_call.1} parent=1 // loop_footer_branch
      %13 = sbr.rel target = $region3
    $region8: #{tpu_custom_call.1} parent=1 // loop_exit
      _
    %241 = vsyncpa [#allocation3], 1
    %s242 = scalar_lea.sflag [#allocation3], 1
    %243 = vsyncpa %s242, 1
    %244 = vsyncpa [#allocation4], 1
    %s245 = scalar_lea.sflag [#allocation4], 1
    %246 = vsyncpa %s245, 1

</llo_original>
